<compile_context>
chip_gen: v7x
topology: tpu7x:2x2x1
jax: 0.10.0
libtpu: 0.0.40
codegen_flags: <defaults>
</compile_context>

<pallas_src>
import functools
import math

import jax
import jax.numpy as jnp
from jax.experimental import pallas as pl
from jax.experimental.pallas import tpu as pltpu


def _round_up(x, m):
    return (x + m - 1) // m * m


def _time_embedding_kernel(t_ref, p_ref, o_ref, *, half, out_c, r1, r2, vcol):
    """One batch tile of the transposed forward pass.

    t_ref : (1, Bt)           timesteps on the lane axis
    p_ref : (rows, vcol + 3)  packed [W1_cos ; W1_sin ; W2 | freqs, b1, b2 cols]
    o_ref : (out_c, Bt)       transposed output tile (batch on lanes)
    """
    t = t_ref[...]                                    # (1, Bt)

    freqs = p_ref[0:half, vcol:vcol + 1]              # (half, 1)
    b1 = p_ref[0:out_c, vcol + 1:vcol + 2]            # (out_c, 1)
    b2 = p_ref[0:out_c, vcol + 2:vcol + 3]            # (out_c, 1)
    w1_cos = p_ref[0:out_c, 0:half]                   # (out_c, half)  = W1[:, :half]
    w1_sin = p_ref[r1:r1 + out_c, 0:half]             # (out_c, half)  = W1[:, half:]
    w2 = p_ref[r2:r2 + out_c, 0:out_c]                # (out_c, out_c)

    tf = freqs * t                                    # (half, Bt), fully lane-packed
    # emb^T = [cos(tf); sin(tf)]; first Linear (y = emb @ W1^T + b1) transposed:
    h = (jnp.dot(w1_cos, jnp.cos(tf), preferred_element_type=jnp.float32)
         + jnp.dot(w1_sin, jnp.sin(tf), preferred_element_type=jnp.float32)
         + b1)                                        # (out_c, Bt)
    h = jnp.maximum(h, 0.0)                           # ReLU
    out = jnp.dot(w2, h, preferred_element_type=jnp.float32) + b2   # (out_c, Bt)
    o_ref[...] = out.astype(o_ref.dtype)              # dense, unmasked lane store


def prepare_time_embedding_params(freqs, w1, b1, w2, b2):
    """One-time packing of all parameters into a single f32 slab.

    freqs : (half,)
    w1    : (out_c, embed_c)  torch nn.Linear layout (kept as-is, no transpose)
    b1    : (out_c,)
    w2    : (out_c, out_c)
    b2    : (out_c,)
    Returns (params_slab, cfg) where cfg holds the static slice offsets.
    """
    half = freqs.shape[0]
    out_c, embed_c = w1.shape
    assert embed_c == 2 * half and w2.shape == (out_c, out_c)
    assert b1.shape == (out_c,) and b2.shape == (out_c,)

    r1 = _round_up(out_c, 8)                 # sublane-aligned row of the W1_sin block
    r2 = r1 + _round_up(out_c, 8)            # sublane-aligned row of the W2 block
    rows = _round_up(r2 + out_c, 8)
    vcol = _round_up(max(half, out_c), 128)  # lane-aligned column block for the vectors
    cols = vcol + 3

    w1f = w1.astype(jnp.float32)
    p = jnp.zeros((rows, cols), jnp.float32)
    p = p.at[0:out_c, 0:half].set(w1f[:, :half])          # applied to cos half
    p = p.at[r1:r1 + out_c, 0:half].set(w1f[:, half:])    # applied to sin half
    p = p.at[r2:r2 + out_c, 0:out_c].set(w2.astype(jnp.float32))
    p = p.at[0:half, vcol].set(freqs.astype(jnp.float32))
    p = p.at[0:out_c, vcol + 1].set(b1.astype(jnp.float32))
    p = p.at[0:out_c, vcol + 2].set(b2.astype(jnp.float32))

    cfg = dict(half=half, embed_c=embed_c, out_c=out_c, r1=r1, r2=r2, vcol=vcol)
    return p, cfg


def time_embedding(timesteps, params, cfg, *, block_b=2048, transposed_output=False):
    """timesteps: (B,) -> (B, out_c) float32 (or (out_c, B) if transposed_output)."""
    B = timesteps.shape[0]
    out_c = cfg["out_c"]
    t_row = timesteps.reshape(1, B).astype(jnp.float32)   # batch on the lane axis

    kernel = functools.partial(
        _time_embedding_kernel,
        half=cfg["half"], out_c=out_c, r1=cfg["r1"], r2=cfg["r2"], vcol=cfg["vcol"])

    if B <= block_b:
        # Everything fits trivially in VMEM: single gridless invocation.
        vmem = pl.BlockSpec(memory_space=pltpu.MemorySpace.VMEM)
        out_t = pl.pallas_call(
            kernel,
            out_shape=jax.ShapeDtypeStruct((out_c, B), jnp.float32),
            in_specs=[vmem, vmem],
            out_specs=vmem,
        )(t_row, params)
    else:
        # 1-D batch grid over the lane axis; the parameter slab stays resident
        # (constant index_map -> no re-DMA); timestep/output row tiles are
        # pipelined.  "parallel" is near-zero-cost on 1-TC chips; for v7x this
        # kernel is launch-bound so we do not force a cross-core split.
        out_t = pl.pallas_call(
            kernel,
            out_shape=jax.ShapeDtypeStruct((out_c, B), jnp.float32),
            grid=(pl.cdiv(B, block_b),),
            in_specs=[
                pl.BlockSpec((1, block_b), lambda i: (0, i)),
                pl.BlockSpec(params.shape, lambda i: (0, 0)),
            ],
            out_specs=pl.BlockSpec((out_c, block_b), lambda i: (0, i)),
            compiler_params=pltpu.CompilerParams(
                dimension_semantics=("parallel",)),
        )(t_row, params)

    if transposed_output:
        return out_t          # (out_c, B): preferred layout for downstream fusion
    return out_t.T            # (B, out_c): matches the PyTorch module


def reference(timesteps, freqs, w1, b1, w2, b2):
    """Pure-JAX reference mirroring the PyTorch forward (torch weight layout)."""
    tf = timesteps[:, None] * freqs[None, :]
    emb = jnp.concatenate([jnp.cos(tf), jnp.sin(tf)], axis=-1)
    h = jnp.maximum(emb @ w1.T + b1, 0.0)
    return h @ w2.T + b2


if __name__ == "__main__":
    # Module hyperparameters (small, consistent with the forward pass).
    embed_c = 32
    out_c = 32
    max_period = 10000
    half = embed_c // 2

    # Buffer identical to the module: exp(-log(max_period) * linspace(0, 1, half)),
    # endpoint included, and the [cos | sin] concat order is preserved below.
    freqs = jnp.exp(
        -math.log(max_period) * jnp.linspace(0.0, 1.0, half, dtype=jnp.float32))

    # Deterministic parameter init, torch nn.Linear layout (out_features, in_features).
    key = jax.random.PRNGKey(0)
    k_t, k_w1, k_b1, k_w2, k_b2, k_t2 = jax.random.split(key, 6)
    lim1 = 1.0 / math.sqrt(embed_c)
    lim2 = 1.0 / math.sqrt(out_c)
    w1 = jax.random.uniform(k_w1, (out_c, embed_c), jnp.float32, -lim1, lim1)
    b1 = jax.random.uniform(k_b1, (out_c,), jnp.float32, -lim1, lim1)
    w2 = jax.random.uniform(k_w2, (out_c, out_c), jnp.float32, -lim2, lim2)
    b2 = jax.random.uniform(k_b2, (out_c,), jnp.float32, -lim2, lim2)

    # One-time parameter packing (hoisted out of the per-step path).
    params, cfg = prepare_time_embedding_params(freqs, w1, b1, w2, b2)

    # Small batch (B=8): gridless single invocation.
    t_small = jax.random.uniform(k_t, (8,), jnp.float32, 0.0, 1000.0)
    out_small = jax.block_until_ready(time_embedding(t_small, params, cfg))
    ref_small = reference(t_small, freqs, w1, b1, w2, b2)
    assert out_small.shape == (8, out_c)
    assert jnp.allclose(out_small, ref_small, atol=2e-4, rtol=2e-4), \
        "small-batch mismatch vs reference"

    # Large batch (B=4480, NOT a multiple of block_b): batched grid path with a
    # masked partial last block; the parameter slab stays resident in VMEM.
    t_big = jax.random.uniform(k_t2, (4480,), jnp.float32, 0.0, 1000.0)
    out_big = jax.block_until_ready(time_embedding(t_big, params, cfg))
    ref_big = reference(t_big, freqs, w1, b1, w2, b2)
    assert out_big.shape == (4480, out_c)
    assert jnp.allclose(out_big, ref_big, atol=2e-4, rtol=2e-4), \
        "batched-grid mismatch vs reference"

    print("KERNEL_OK")
</pallas_src>

<mosaic_0001>
module attributes {stable_mosaic.version = 11 : i64} {
  func.func @_time_embedding_kernel(%arg0: memref<1x8xf32, #tpu.memory_space<vmem>>, %arg1: memref<96x131xf32, #tpu.memory_space<vmem>>, %arg2: memref<32x8xf32, #tpu.memory_space<vmem>>) attributes {dimension_semantics = [], scalar_prefetch = 0 : i64, scratch_operands = 0 : i64, tpu.core_type = #tpu.core_type<tc>} {
    %c0 = arith.constant 0 : index
    %c0_0 = arith.constant 0 : index
    %0 = vector.load %arg0[%c0, %c0_0] : memref<1x8xf32, #tpu.memory_space<vmem>>, vector<1x8xf32>
    %c0_1 = arith.constant 0 : index
    %c128 = arith.constant 128 : index
    %1 = vector.load %arg1[%c0_1, %c128] : memref<96x131xf32, #tpu.memory_space<vmem>>, vector<16x1xf32>
    %c0_2 = arith.constant 0 : index
    %c129 = arith.constant 129 : index
    %2 = vector.load %arg1[%c0_2, %c129] : memref<96x131xf32, #tpu.memory_space<vmem>>, vector<32x1xf32>
    %c0_3 = arith.constant 0 : index
    %c130 = arith.constant 130 : index
    %3 = vector.load %arg1[%c0_3, %c130] : memref<96x131xf32, #tpu.memory_space<vmem>>, vector<32x1xf32>
    %c0_4 = arith.constant 0 : index
    %c0_5 = arith.constant 0 : index
    %4 = vector.load %arg1[%c0_4, %c0_5] : memref<96x131xf32, #tpu.memory_space<vmem>>, vector<32x16xf32>
    %c32 = arith.constant 32 : index
    %c0_6 = arith.constant 0 : index
    %5 = vector.load %arg1[%c32, %c0_6] : memref<96x131xf32, #tpu.memory_space<vmem>>, vector<32x16xf32>
    %c64 = arith.constant 64 : index
    %c0_7 = arith.constant 0 : index
    %6 = vector.load %arg1[%c64, %c0_7] : memref<96x131xf32, #tpu.memory_space<vmem>>, vector<32x32xf32>
    %7 = vector.broadcast %1 : vector<16x1xf32> to vector<16x8xf32>
    %8 = vector.broadcast %0 : vector<1x8xf32> to vector<16x8xf32>
    %9 = arith.mulf %7, %8 : vector<16x8xf32>
    %10 = math.cos %9 : vector<16x8xf32>
    %cst = arith.constant dense<0.000000e+00> : vector<32x8xf32>
    %11 = tpu.matmul %4, %10, %cst {dimension_numbers = #tpu.dot_dimension_numbers<[1], [0], [0], [1], [0, 0, 1, 1], [], []>} : vector<32x16xf32>, vector<16x8xf32>, vector<32x8xf32> -> vector<32x8xf32>
    %12 = math.sin %9 : vector<16x8xf32>
    %cst_8 = arith.constant dense<0.000000e+00> : vector<32x8xf32>
    %13 = tpu.matmul %5, %12, %cst_8 {dimension_numbers = #tpu.dot_dimension_numbers<[1], [0], [0], [1], [0, 0, 1, 1], [], []>} : vector<32x16xf32>, vector<16x8xf32>, vector<32x8xf32> -> vector<32x8xf32>
    %14 = arith.addf %11, %13 : vector<32x8xf32>
    %15 = vector.broadcast %2 : vector<32x1xf32> to vector<32x8xf32>
    %16 = arith.addf %14, %15 : vector<32x8xf32>
    %cst_9 = arith.constant 0.000000e+00 : f32
    %17 = vector.broadcast %cst_9 : f32 to vector<32x8xf32>
    %18 = arith.maximumf %16, %17 : vector<32x8xf32>
    %cst_10 = arith.constant dense<0.000000e+00> : vector<32x8xf32>
    %19 = tpu.matmul %6, %18, %cst_10 {dimension_numbers = #tpu.dot_dimension_numbers<[1], [0], [0], [1], [0, 0, 1, 1], [], []>} : vector<32x32xf32>, vector<32x8xf32>, vector<32x8xf32> -> vector<32x8xf32>
    %20 = vector.broadcast %3 : vector<32x1xf32> to vector<32x8xf32>
    %21 = arith.addf %19, %20 : vector<32x8xf32>
    %c0_11 = arith.constant 0 : index
    %c0_12 = arith.constant 0 : index
    %22 = vector.load %arg2[%c0_11, %c0_12] : memref<32x8xf32, #tpu.memory_space<vmem>>, vector<32x8xf32>
    tpu.vector_store %arg2[%c0_11, %c0_12], %21 {strides = array<i32>} : memref<32x8xf32, #tpu.memory_space<vmem>>, vector<32x8xf32>,
    return
  }
}

</mosaic_0001>

<llo_original>
// kernel: tpu_custom_call.1
$region0: #{tpu_custom_call.1}
  #allocation0 [shape = 'u32[]', space=smem, size = 0x4, offset = 0x4, fixed_abs, tag = 'smem constant byte address 0x4 - core index']
  #allocation1 [shape = 'u32[144,128]{1,0:T(1,128)}', space=vmem, size = 0x12000, scoped, tag = 'internal scratch']
  %s0 = inlined_call_operand.vmem [shape: f32[1,8], index: 0, kind: input, shape index: {}]
  %s1 = inlined_call_operand.vmem [shape: f32[96,131], index: 1, kind: input, shape index: {}]
  %s2 = inlined_call_operand.vmem [shape: f32[32,8], index: 2, kind: output, shape index: {}]
  %s3 = sld [smem:[#allocation0]]
  $region18: #{tpu_custom_call.1} parent=0
    _
  %s5 = ssub.s32 1, %s3
  %s6 = scalar_select 0, %s5, %s3
  // Predicated region
  $region2: #{tpu_custom_call.1} parent=0 // pred_check
    _
  $region3: #{tpu_custom_call.1} parent=0 // pred_check_branch
    %8 = sbr.rel (0) target = $region5
  $region4: #{tpu_custom_call.1} parent=0 // pred_region
    _
  $region5: #{tpu_custom_call.1} parent=0 // pred_fallthru
    _
  // Predicated region
  $region6: #{tpu_custom_call.1} parent=0 // pred_check
    _
  $region7: #{tpu_custom_call.1} parent=0 // pred_check_branch
    %10 = sbr.rel (0) target = $region9
  $region8: #{tpu_custom_call.1} parent=0 // pred_region
    _
  $region9: #{tpu_custom_call.1} parent=0 // pred_fallthru
    _
  %v11 = vld [vmem:[%s0] sm:$0x1]
  %v12 = vld [vmem:[%s1 + $0x8] sm:$0xff]
  %v13 = vld [vmem:[%s1 + $0x18] sm:$0xff]
  %v14 = vld [vmem:[%s1 + $0x28] sm:$0xff]
  %v15 = vld [vmem:[%s1 + $0x38] sm:$0xff]
  %v16 = vld [vmem:[%s1] sm:$0xff]
  %v17 = vld [vmem:[%s1 + $0x10] sm:$0xff]
  %v18 = vld [vmem:[%s1 + $0x20] sm:$0xff]
  %v19 = vld [vmem:[%s1 + $0x30] sm:$0xff]
  %v20 = vld [vmem:[%s1 + $0x40] sm:$0xff]
  %v21 = vld [vmem:[%s1 + $0x50] sm:$0xff]
  %v22 = vld [vmem:[%s1 + $0x60] sm:$0xff]
  %v23 = vld [vmem:[%s1 + $0x70] sm:$0xff]
  %v24 = vld [vmem:[%s1 + $0x80] sm:$0xff]
  %v25 = vld [vmem:[%s1 + $0x90] sm:$0xff]
  %v26 = vld [vmem:[%s1 + $0xa0] sm:$0xff]
  %v27 = vld [vmem:[%s1 + $0xb0] sm:$0xff]
  %29 = vset.pattern.permute.xlu0 0
  %30 = vperm.xlu0 %29, %v12
  %v31 = vpop.permute.xlu0 %30
  %34 = vset.pattern.permute.xlu0 0
  %35 = vperm.xlu0 %34, %v13
  %v36 = vpop.permute.xlu0 %35
  %v39 = vlaneseq
  %v40 = vshrl.u32 %v39, 7
  %v41 = vsub.s32 0, %v40
  %v42 = vrot.slane %v11, %v41
  %v44 = vmul.f32 %v31, %v42
  %v45 = vmul.f32 %v36, %v42
  %v46 = vand.u32 2147483647, %v44
  %vm47 = vcmp.le.f32.partialorder %v46, 0.7853982
  %vm48 = vcmp.lt.s32.totalorder %v44, 0
  %v49 = vand.u32 %v44, 2139095040
  %v50 = vshrl.u32 %v49, 23
  %v51 = vsub.s32 %v50, 127
  %v52 = vand.u32 2147483647, %v44
  %v53 = vand.u32 %v52, 8388607
  %v54 = vor.u32 %v53, 8388608
  %v55 = vsub.s32 0, %v54
  %v56 = vadd.s32 %v51, 1
  %vm57 = vcmp.gt.s32.totalorder %v56, 0
  %v58 = vsel %vm57, %v56, 0
  %v59 = vshrl.u32 %v58, 5
  %v60 = vand.u32 %v58, 31
  %v61 = vsub.s32 32, %v60
  %v62 = vshrl.u32 683565275, %v61
  %v63 = vshll.u32 683565275, %v60
  %v64 = vshrl.u32 2475754826, %v61
  %v65 = vor.u32 %v63, %v64
  %v66 = vshll.u32 2475754826, %v60
  %v67 = vshrl.u32 2131351028, %v61
  %v68 = vor.u32 %v66, %v67
  %v69 = vshll.u32 2131351028, %v60
  %v70 = vshrl.u32 2102212464, %v61
  %v71 = vor.u32 %v69, %v70
  %v72 = vshll.u32 2102212464, %v60
  %v73 = vshrl.u32 920167782, %v61
  %v74 = vor.u32 %v72, %v73
  %v75 = vshll.u32 920167782, %v60
  %v76 = vshrl.u32 1326507024, %v61
  %v77 = vor.u32 %v75, %v76
  %vm78 = vcmp.lt.s32.totalorder %v59, 1
  %vm79 = vcmp.lt.s32.totalorder %v59, 2
  %vm80 = vcmp.lt.s32.totalorder %v59, 3
  %vm81 = vcmp.lt.s32.totalorder %v59, 4
  %v82 = vsel %vm78, %v62, %v65
  %v83 = vsel %vm81, %v71, 2102212464
  %v84 = vsel %vm80, %v68, %v83
  %v85 = vsel %vm79, %v82, %v84
  %v86 = vsel %vm78, %v65, %v68
  %v87 = vsel %vm81, %v74, 920167782
  %v88 = vsel %vm80, %v71, %v87
  %v89 = vsel %vm79, %v86, %v88
  %v90 = vsel %vm78, %v68, %v71
  %v91 = vsel %vm81, %v77, 1326507024
  %v92 = vsel %vm80, %v74, %v91
  %v93 = vsel %vm79, %v90, %v92
  %v94 = vshll.u32 %v54, 8
  %v95 = vmul.u32.u64.compose %v94, %v93
  %v96 = vextract.low.u32 %v95
  %v97 = vextract.high.u32 %v95
  %v98 = vmul.u32.u64.compose %v94, %v89
  %v99 = vextract.low.u32 %v98
  %v100 = vextract.high.u32 %v98
  %v101 = vmul.u32 %v94, %v85
  %v102 = vadd.s32 %v97, %v99
  %vm103 = vc.u32 %v97, %v99
  %v104 = vadd.s32 %v100, 1
  %v105 = vsel %vm103, %v104, %v100
  %v106 = vadd.s32 %v101, %v105
  %v107 = vadd.s32 %v106, 536870912
  %v108 = vshrl.u32 %v107, 30
  %v109 = vshll.u32 %v108, 30
  %v110 = vsub.s32 %v106, %v109
  %vm111 = vcmp.lt.s32.totalorder %v110, 0
  %v112 = vsub.s32 0, %v110
  %v113 = vsel %vm111, %v112, %v110
  %v114 = vclz %v113
  %v115 = vsub.s32 %v114, 2
  %vm116 = vcmp.gt.s32.totalorder 0, %v115
  %v117 = vsel %vm116, 0, %v115
  %v118 = vsub.s32 32, %v117
  %v119 = vshll.u32 %v110, %v117
  %v120 = vshrl.u32 %v102, %v118
  %v121 = vor.u32 %v119, %v120
  %v122 = vsub.s32 4294967266, %v117
  %v123 = vadd.s32 %v122, 127
  %v124 = vshll.u32 %v123, 23
  %v125 = vor.u32 4788187, %v124
  %v126 = vand.u32 2147483647, %v125
  %v128 = vcvt.s32.f32 %v121
  %v129 = vmul.f32 %v128, %v126
  %v130 = vxor.u32 %v129, 2147483648
  %v131 = vsel %vm48, %v130, %v129
  %v132 = vsub.s32 4, %v108
  %v133 = vsel %vm48, %v132, %v108
  %v134 = vsel %vm47, %v44, %v131
  %v135 = vsel %vm47, 0, %v133
  %v136 = vcosq.f32.pop %v134
  %v137 = vsinq.f32.pop %v134
  %vm138 = vweird.f32 %v44
  %v139 = vand.u32 %v135, 3
  %vm140 = vcmp.lt.s32.totalorder %v139, 2
  %vm141 = vcmp.eq.s32.totalorder %v139, 0
  %v142 = vxor.u32 %v137, 2147483648
  %v143 = vsel %vm141, %v136, %v142
  %vm144 = vcmp.eq.s32.totalorder %v139, 2
  %v145 = vxor.u32 %v136, 2147483648
  %v146 = vsel %vm144, %v145, %v137
  %v147 = vsel %vm140, %v143, %v146
  %v148 = vsel %vm138, nan, %v147
  %v149 = vand.u32 2147483647, %v45
  %vm150 = vcmp.le.f32.partialorder %v149, 0.7853982
  %vm151 = vcmp.lt.s32.totalorder %v45, 0
  %v152 = vand.u32 %v45, 2139095040
  %v153 = vshrl.u32 %v152, 23
  %v154 = vsub.s32 %v153, 127
  %v155 = vand.u32 2147483647, %v45
  %v156 = vand.u32 %v155, 8388607
  %v157 = vor.u32 %v156, 8388608
  %v158 = vsub.s32 0, %v157
  %v159 = vadd.s32 %v154, 1
  %vm160 = vcmp.gt.s32.totalorder %v159, 0
  %v161 = vsel %vm160, %v159, 0
  %v162 = vshrl.u32 %v161, 5
  %v163 = vand.u32 %v161, 31
  %v164 = vsub.s32 32, %v163
  %v165 = vshrl.u32 683565275, %v164
  %v166 = vshll.u32 683565275, %v163
  %v167 = vshrl.u32 2475754826, %v164
  %v168 = vor.u32 %v166, %v167
  %v169 = vshll.u32 2475754826, %v163
  %v170 = vshrl.u32 2131351028, %v164
  %v171 = vor.u32 %v169, %v170
  %v172 = vshll.u32 2131351028, %v163
  %v173 = vshrl.u32 2102212464, %v164
  %v174 = vor.u32 %v172, %v173
  %v175 = vshll.u32 2102212464, %v163
  %v176 = vshrl.u32 920167782, %v164
  %v177 = vor.u32 %v175, %v176
  %v178 = vshll.u32 920167782, %v163
  %v179 = vshrl.u32 1326507024, %v164
  %v180 = vor.u32 %v178, %v179
  %vm181 = vcmp.lt.s32.totalorder %v162, 1
  %vm182 = vcmp.lt.s32.totalorder %v162, 2
  %vm183 = vcmp.lt.s32.totalorder %v162, 3
  %vm184 = vcmp.lt.s32.totalorder %v162, 4
  %v185 = vsel %vm181, %v165, %v168
  %v186 = vsel %vm184, %v174, 2102212464
  %v187 = vsel %vm183, %v171, %v186
  %v188 = vsel %vm182, %v185, %v187
  %v189 = vsel %vm181, %v168, %v171
  %v190 = vsel %vm184, %v177, 920167782
  %v191 = vsel %vm183, %v174, %v190
  %v192 = vsel %vm182, %v189, %v191
  %v193 = vsel %vm181, %v171, %v174
  %v194 = vsel %vm184, %v180, 1326507024
  %v195 = vsel %vm183, %v177, %v194
  %v196 = vsel %vm182, %v193, %v195
  %v197 = vshll.u32 %v157, 8
  %v198 = vmul.u32.u64.compose %v197, %v196
  %v199 = vextract.low.u32 %v198
  %v200 = vextract.high.u32 %v198
  %v201 = vmul.u32.u64.compose %v197, %v192
  %v202 = vextract.low.u32 %v201
  %v203 = vextract.high.u32 %v201
  %v204 = vmul.u32 %v197, %v188
  %v205 = vadd.s32 %v200, %v202
  %vm206 = vc.u32 %v200, %v202
  %v207 = vadd.s32 %v203, 1
  %v208 = vsel %vm206, %v207, %v203
  %v209 = vadd.s32 %v204, %v208
  %v210 = vadd.s32 %v209, 536870912
  %v211 = vshrl.u32 %v210, 30
  %v212 = vshll.u32 %v211, 30
  %v213 = vsub.s32 %v209, %v212
  %vm214 = vcmp.lt.s32.totalorder %v213, 0
  %v215 = vsub.s32 0, %v213
  %v216 = vsel %vm214, %v215, %v213
  %v217 = vclz %v216
  %v218 = vsub.s32 %v217, 2
  %vm219 = vcmp.gt.s32.totalorder 0, %v218
  %v220 = vsel %vm219, 0, %v218
  %v221 = vsub.s32 32, %v220
  %v222 = vshll.u32 %v213, %v220
  %v223 = vshrl.u32 %v205, %v221
  %v224 = vor.u32 %v222, %v223
  %v225 = vsub.s32 4294967266, %v220
  %v226 = vadd.s32 %v225, 127
  %v227 = vshll.u32 %v226, 23
  %v228 = vor.u32 4788187, %v227
  %v229 = vand.u32 2147483647, %v228
  %v231 = vcvt.s32.f32 %v224
  %v232 = vmul.f32 %v231, %v229
  %v233 = vxor.u32 %v232, 2147483648
  %v234 = vsel %vm151, %v233, %v232
  %v235 = vsub.s32 4, %v211
  %v236 = vsel %vm151, %v235, %v211
  %v237 = vsel %vm150, %v45, %v234
  %v238 = vsel %vm150, 0, %v236
  %v239 = vcosq.f32.pop %v237
  %v240 = vsinq.f32.pop %v237
  %vm241 = vweird.f32 %v45
  %v242 = vand.u32 %v238, 3
  %vm243 = vcmp.lt.s32.totalorder %v242, 2
  %vm244 = vcmp.eq.s32.totalorder %v242, 0
  %v245 = vxor.u32 %v240, 2147483648
  %v246 = vsel %vm244, %v239, %v245
  %vm247 = vcmp.eq.s32.totalorder %v242, 2
  %v248 = vxor.u32 %v239, 2147483648
  %v249 = vsel %vm247, %v248, %v240
  %v250 = vsel %vm243, %v246, %v249
  %v251 = vsel %vm241, nan, %v250
  %v252 = vand.u32 2147483647, %v44
  %vm253 = vcmp.le.f32.partialorder %v252, 0.7853982
  %vm254 = vcmp.lt.s32.totalorder %v44, 0
  %v255 = vand.u32 %v44, 2139095040
  %v256 = vshrl.u32 %v255, 23
  %v257 = vsub.s32 %v256, 127
  %v258 = vand.u32 2147483647, %v44
  %v259 = vand.u32 %v258, 8388607
  %v260 = vor.u32 %v259, 8388608
  %v261 = vsub.s32 0, %v260
  %v262 = vadd.s32 %v257, 1
  %vm263 = vcmp.gt.s32.totalorder %v262, 0
  %v264 = vsel %vm263, %v262, 0
  %v265 = vshrl.u32 %v264, 5
  %v266 = vand.u32 %v264, 31
  %v267 = vsub.s32 32, %v266
  %v268 = vshrl.u32 683565275, %v267
  %v269 = vshll.u32 683565275, %v266
  %v270 = vshrl.u32 2475754826, %v267
  %v271 = vor.u32 %v269, %v270
  %v272 = vshll.u32 2475754826, %v266
  %v273 = vshrl.u32 2131351028, %v267
  %v274 = vor.u32 %v272, %v273
  %v275 = vshll.u32 2131351028, %v266
  %v276 = vshrl.u32 2102212464, %v267
  %v277 = vor.u32 %v275, %v276
  %v278 = vshll.u32 2102212464, %v266
  %v279 = vshrl.u32 920167782, %v267
  %v280 = vor.u32 %v278, %v279
  %v281 = vshll.u32 920167782, %v266
  %v282 = vshrl.u32 1326507024, %v267
  %v283 = vor.u32 %v281, %v282
  %vm284 = vcmp.lt.s32.totalorder %v265, 1
  %vm285 = vcmp.lt.s32.totalorder %v265, 2
  %vm286 = vcmp.lt.s32.totalorder %v265, 3
  %vm287 = vcmp.lt.s32.totalorder %v265, 4
  %v288 = vsel %vm284, %v268, %v271
  %v289 = vsel %vm287, %v277, 2102212464
  %v290 = vsel %vm286, %v274, %v289
  %v291 = vsel %vm285, %v288, %v290
  %v292 = vsel %vm284, %v271, %v274
  %v293 = vsel %vm287, %v280, 920167782
  %v294 = vsel %vm286, %v277, %v293
  %v295 = vsel %vm285, %v292, %v294
  %v296 = vsel %vm284, %v274, %v277
  %v297 = vsel %vm287, %v283, 1326507024
  %v298 = vsel %vm286, %v280, %v297
  %v299 = vsel %vm285, %v296, %v298
  %v300 = vshll.u32 %v260, 8
  %v301 = vmul.u32.u64.compose %v300, %v299
  %v302 = vextract.low.u32 %v301
  %v303 = vextract.high.u32 %v301
  %v304 = vmul.u32.u64.compose %v300, %v295
  %v305 = vextract.low.u32 %v304
  %v306 = vextract.high.u32 %v304
  %v307 = vmul.u32 %v300, %v291
  %v308 = vadd.s32 %v303, %v305
  %vm309 = vc.u32 %v303, %v305
  %v310 = vadd.s32 %v306, 1
  %v311 = vsel %vm309, %v310, %v306
  %v312 = vadd.s32 %v307, %v311
  %v313 = vadd.s32 %v312, 536870912
  %v314 = vshrl.u32 %v313, 30
  %v315 = vshll.u32 %v314, 30
  %v316 = vsub.s32 %v312, %v315
  %vm317 = vcmp.lt.s32.totalorder %v316, 0
  %v318 = vsub.s32 0, %v316
  %v319 = vsel %vm317, %v318, %v316
  %v320 = vclz %v319
  %v321 = vsub.s32 %v320, 2
  %vm322 = vcmp.gt.s32.totalorder 0, %v321
  %v323 = vsel %vm322, 0, %v321
  %v324 = vsub.s32 32, %v323
  %v325 = vshll.u32 %v316, %v323
  %v326 = vshrl.u32 %v308, %v324
  %v327 = vor.u32 %v325, %v326
  %v328 = vsub.s32 4294967266, %v323
  %v329 = vadd.s32 %v328, 127
  %v330 = vshll.u32 %v329, 23
  %v331 = vor.u32 4788187, %v330
  %v332 = vand.u32 2147483647, %v331
  %v334 = vcvt.s32.f32 %v327
  %v335 = vmul.f32 %v334, %v332
  %v336 = vxor.u32 %v335, 2147483648
  %v337 = vsel %vm254, %v336, %v335
  %v338 = vsub.s32 4, %v314
  %v339 = vsel %vm254, %v338, %v314
  %v340 = vsel %vm253, %v44, %v337
  %v341 = vsel %vm253, 0, %v339
  %v342 = vcosq.f32.pop %v340
  %v343 = vsinq.f32.pop %v340
  %vm344 = vweird.f32 %v44
  %v345 = vadd.s32 %v341, 3
  %v346 = vand.u32 %v345, 3
  %vm347 = vcmp.lt.s32.totalorder %v346, 2
  %vm348 = vcmp.eq.s32.totalorder %v346, 0
  %v349 = vxor.u32 %v343, 2147483648
  %v350 = vsel %vm348, %v342, %v349
  %vm351 = vcmp.eq.s32.totalorder %v346, 2
  %v352 = vxor.u32 %v342, 2147483648
  %v353 = vsel %vm351, %v352, %v343
  %v354 = vsel %vm347, %v350, %v353
  %v355 = vsel %vm344, nan, %v354
  %v356 = vand.u32 2147483647, %v45
  %vm357 = vcmp.le.f32.partialorder %v356, 0.7853982
  %vm358 = vcmp.lt.s32.totalorder %v45, 0
  %v359 = vand.u32 %v45, 2139095040
  %v360 = vshrl.u32 %v359, 23
  %v361 = vsub.s32 %v360, 127
  %v362 = vand.u32 2147483647, %v45
  %v363 = vand.u32 %v362, 8388607
  %v364 = vor.u32 %v363, 8388608
  %v365 = vsub.s32 0, %v364
  %v366 = vadd.s32 %v361, 1
  %vm367 = vcmp.gt.s32.totalorder %v366, 0
  %v368 = vsel %vm367, %v366, 0
  %v369 = vshrl.u32 %v368, 5
  %v370 = vand.u32 %v368, 31
  %v371 = vsub.s32 32, %v370
  %v372 = vshrl.u32 683565275, %v371
  %v373 = vshll.u32 683565275, %v370
  %v374 = vshrl.u32 2475754826, %v371
  %v375 = vor.u32 %v373, %v374
  %v376 = vshll.u32 2475754826, %v370
  %v377 = vshrl.u32 2131351028, %v371
  %v378 = vor.u32 %v376, %v377
  %v379 = vshll.u32 2131351028, %v370
  %v380 = vshrl.u32 2102212464, %v371
  %v381 = vor.u32 %v379, %v380
  %v382 = vshll.u32 2102212464, %v370
  %v383 = vshrl.u32 920167782, %v371
  %v384 = vor.u32 %v382, %v383
  %v385 = vshll.u32 920167782, %v370
  %v386 = vshrl.u32 1326507024, %v371
  %v387 = vor.u32 %v385, %v386
  %vm388 = vcmp.lt.s32.totalorder %v369, 1
  %vm389 = vcmp.lt.s32.totalorder %v369, 2
  %vm390 = vcmp.lt.s32.totalorder %v369, 3
  %vm391 = vcmp.lt.s32.totalorder %v369, 4
  %v392 = vsel %vm388, %v372, %v375
  %v393 = vsel %vm391, %v381, 2102212464
  %v394 = vsel %vm390, %v378, %v393
  %v395 = vsel %vm389, %v392, %v394
  %v396 = vsel %vm388, %v375, %v378
  %v397 = vsel %vm391, %v384, 920167782
  %v398 = vsel %vm390, %v381, %v397
  %v399 = vsel %vm389, %v396, %v398
  %v400 = vsel %vm388, %v378, %v381
  %v401 = vsel %vm391, %v387, 1326507024
  %v402 = vsel %vm390, %v384, %v401
  %v403 = vsel %vm389, %v400, %v402
  %v404 = vshll.u32 %v364, 8
  %v405 = vmul.u32.u64.compose %v404, %v403
  %v406 = vextract.low.u32 %v405
  %v407 = vextract.high.u32 %v405
  %v408 = vmul.u32.u64.compose %v404, %v399
  %v409 = vextract.low.u32 %v408
  %v410 = vextract.high.u32 %v408
  %v411 = vmul.u32 %v404, %v395
  %v412 = vadd.s32 %v407, %v409
  %vm413 = vc.u32 %v407, %v409
  %v414 = vadd.s32 %v410, 1
  %v415 = vsel %vm413, %v414, %v410
  %v416 = vadd.s32 %v411, %v415
  %v417 = vadd.s32 %v416, 536870912
  %v418 = vshrl.u32 %v417, 30
  %v419 = vshll.u32 %v418, 30
  %v420 = vsub.s32 %v416, %v419
  %vm421 = vcmp.lt.s32.totalorder %v420, 0
  %v422 = vsub.s32 0, %v420
  %v423 = vsel %vm421, %v422, %v420
  %v424 = vclz %v423
  %v425 = vsub.s32 %v424, 2
  %vm426 = vcmp.gt.s32.totalorder 0, %v425
  %v427 = vsel %vm426, 0, %v425
  %v428 = vsub.s32 32, %v427
  %v429 = vshll.u32 %v420, %v427
  %v430 = vshrl.u32 %v412, %v428
  %v431 = vor.u32 %v429, %v430
  %v432 = vsub.s32 4294967266, %v427
  %v433 = vadd.s32 %v432, 127
  %v434 = vshll.u32 %v433, 23
  %v435 = vor.u32 4788187, %v434
  %v436 = vand.u32 2147483647, %v435
  %v438 = vcvt.s32.f32 %v431
  %v439 = vmul.f32 %v438, %v436
  %v440 = vxor.u32 %v439, 2147483648
  %v441 = vsel %vm358, %v440, %v439
  %v442 = vsub.s32 4, %v418
  %v443 = vsel %vm358, %v442, %v418
  %v444 = vsel %vm357, %v45, %v441
  %v445 = vsel %vm357, 0, %v443
  %v446 = vcosq.f32.pop %v444
  %v447 = vsinq.f32.pop %v444
  %vm448 = vweird.f32 %v45
  %v449 = vadd.s32 %v445, 3
  %v450 = vand.u32 %v449, 3
  %vm451 = vcmp.lt.s32.totalorder %v450, 2
  %vm452 = vcmp.eq.s32.totalorder %v450, 0
  %v453 = vxor.u32 %v447, 2147483648
  %v454 = vsel %vm452, %v446, %v453
  %vm455 = vcmp.eq.s32.totalorder %v450, 2
  %v456 = vxor.u32 %v446, 2147483648
  %v457 = vsel %vm455, %v456, %v447
  %v458 = vsel %vm451, %v454, %v457
  %v459 = vsel %vm448, nan, %v458
  %vm460 = vcmask 130048
  %v462 = vsel %vm460, %v20, 0
  %v465 = vsel %vm460, %v21, 0
  %v468 = vsel %vm460, %v22, 0
  %v471 = vsel %vm460, %v23, 0
  %473 = vmatprep.subr.mxu0 0.0
  %474 = vmatpush1.msra.mxu0 %v355
  %475 = vmatprep.subr.mxu0 0.0
  %476 = vmatpush1.msra.mxu0 %v459
  %477 = vmatprep.subr.mxu0 0.0
  %478 = vmatpush1.msra.mxu0 0.0
  %479 = vmatprep.subr.mxu0 0.0
  %480 = vmatpush1.msra.mxu0 0.0
  %481 = vmatprep.subr.mxu0 0.0
  %482 = vmatpush1.msra.mxu0 0.0
  %483 = vmatprep.subr.mxu0 0.0
  %484 = vmatpush1.msra.mxu0 0.0
  %485 = vmatprep.subr.mxu0 0.0
  %486 = vmatpush1.msra.mxu0 0.0
  %487 = vmatprep.subr.mxu0 0.0
  %488 = vmatpush1.msra.mxu0 0.0
  %489 = vmatprep.subr.mxu0 0.0
  %490 = vmatpush1.msra.mxu0 0.0
  %491 = vmatprep.subr.mxu0 0.0
  %492 = vmatpush1.msra.mxu0 0.0
  %493 = vmatprep.subr.mxu0 0.0
  %494 = vmatpush1.msra.mxu0 0.0
  %495 = vmatprep.subr.mxu0 0.0
  %496 = vmatpush1.msra.mxu0 0.0
  %497 = vmatprep.subr.mxu0 0.0
  %498 = vmatpush1.msra.mxu0 0.0
  %499 = vmatprep.subr.mxu0 0.0
  %500 = vmatpush1.msra.mxu0 0.0
  %501 = vmatprep.subr.mxu0 0.0
  %502 = vmatpush1.msra.mxu0 0.0
  %503 = vmatprep.subr.mxu0 0.0
  %504 = vmatpush1.msra.mxu0 0.0
  %505 = vmatprep.subr.mxu0 0.0
  %506 = vmatpush1.msra.mxu0 0.0
  %507 = vmatprep.subr.mxu0 0.0
  %508 = vmatpush1.msra.mxu0 0.0
  %509 = vmatprep.subr.mxu0 0.0
  %510 = vmatpush1.msra.mxu0 0.0
  %511 = vmatprep.subr.mxu0 0.0
  %512 = vmatpush1.msra.mxu0 0.0
  %513 = vmatprep.subr.mxu0 0.0
  %514 = vmatpush1.msra.mxu0 0.0
  %515 = vmatprep.subr.mxu0 0.0
  %516 = vmatpush1.msra.mxu0 0.0
  %517 = vmatprep.subr.mxu0 0.0
  %518 = vmatpush1.msra.mxu0 0.0
  %519 = vmatprep.subr.mxu0 0.0
  %520 = vmatpush1.msra.mxu0 0.0
  %521 = vmatprep.subr.mxu0 0.0
  %522 = vmatpush1.msra.mxu0 0.0
  %523 = vmatprep.subr.mxu0 0.0
  %524 = vmatpush1.msra.mxu0 0.0
  %525 = vmatprep.subr.mxu0 0.0
  %526 = vmatpush1.msra.mxu0 0.0
  %527 = vmatprep.subr.mxu0 0.0
  %528 = vmatpush1.msra.mxu0 0.0
  %529 = vmatprep.subr.mxu0 0.0
  %530 = vmatpush1.msra.mxu0 0.0
  %531 = vmatprep.subr.mxu0 0.0
  %532 = vmatpush1.msra.mxu0 0.0
  %533 = vmatprep.subr.mxu0 0.0
  %534 = vmatpush1.msra.mxu0 0.0
  %535 = vmatprep.subr.mxu0 0.0
  %536 = vmatpush1.msra.mxu0 0.0
  %537 = vmatprep.mubr.f32.mxu0 0.0
  %538 = vmatmul.mubr.f32.gmra.mrb[0].mxu0 %v462
  %v539 = vpop.f32.mrb[0].mxu0
  %v540 = vadd.f32 0.0, %v539
  %v541 = vpop.f32.mrb[0].mxu0
  %542 = vmatprep.mubr.f32.mxu0 0.0
  %543 = vmatmul.mubr.f32.gmra.mrb[0].mxu0 %v465
  %v544 = vpop.f32.mrb[0].mxu0
  %v545 = vadd.f32 0.0, %v544
  %v546 = vpop.f32.mrb[0].mxu0
  %547 = vmatprep.mubr.f32.mxu0 0.0
  %548 = vmatmul.mubr.f32.gmra.mrb[0].mxu0 %v468
  %v549 = vpop.f32.mrb[0].mxu0
  %v550 = vadd.f32 0.0, %v549
  %v551 = vpop.f32.mrb[0].mxu0
  %552 = vmatprep.mubr.f32.mxu0 0.0
  %553 = vmatmul.mubr.f32.gmra.mrb[0].mxu0 %v471
  %v554 = vpop.f32.mrb[0].mxu0
  %v555 = vadd.f32 0.0, %v554
  %v556 = vpop.f32.mrb[0].mxu0
  %557 = vdwg.mxu0
  %v559 = vsel %vm460, %v16, 0
  %v562 = vsel %vm460, %v17, 0
  %v565 = vsel %vm460, %v18, 0
  %v568 = vsel %vm460, %v19, 0
  %570 = vmatprep.subr.mxu0 0.0
  %571 = vmatpush1.msra.mxu0 %v148
  %572 = vmatprep.subr.mxu0 0.0
  %573 = vmatpush1.msra.mxu0 %v251
  %574 = vmatprep.subr.mxu0 0.0
  %575 = vmatpush1.msra.mxu0 0.0
  %576 = vmatprep.subr.mxu0 0.0
  %577 = vmatpush1.msra.mxu0 0.0
  %578 = vmatprep.subr.mxu0 0.0
  %579 = vmatpush1.msra.mxu0 0.0
  %580 = vmatprep.subr.mxu0 0.0
  %581 = vmatpush1.msra.mxu0 0.0
  %582 = vmatprep.subr.mxu0 0.0
  %583 = vmatpush1.msra.mxu0 0.0
  %584 = vmatprep.subr.mxu0 0.0
  %585 = vmatpush1.msra.mxu0 0.0
  %586 = vmatprep.subr.mxu0 0.0
  %587 = vmatpush1.msra.mxu0 0.0
  %588 = vmatprep.subr.mxu0 0.0
  %589 = vmatpush1.msra.mxu0 0.0
  %590 = vmatprep.subr.mxu0 0.0
  %591 = vmatpush1.msra.mxu0 0.0
  %592 = vmatprep.subr.mxu0 0.0
  %593 = vmatpush1.msra.mxu0 0.0
  %594 = vmatprep.subr.mxu0 0.0
  %595 = vmatpush1.msra.mxu0 0.0
  %596 = vmatprep.subr.mxu0 0.0
  %597 = vmatpush1.msra.mxu0 0.0
  %598 = vmatprep.subr.mxu0 0.0
  %599 = vmatpush1.msra.mxu0 0.0
  %600 = vmatprep.subr.mxu0 0.0
  %601 = vmatpush1.msra.mxu0 0.0
  %602 = vmatprep.subr.mxu0 0.0
  %603 = vmatpush1.msra.mxu0 0.0
  %604 = vmatprep.subr.mxu0 0.0
  %605 = vmatpush1.msra.mxu0 0.0
  %606 = vmatprep.subr.mxu0 0.0
  %607 = vmatpush1.msra.mxu0 0.0
  %608 = vmatprep.subr.mxu0 0.0
  %609 = vmatpush1.msra.mxu0 0.0
  %610 = vmatprep.subr.mxu0 0.0
  %611 = vmatpush1.msra.mxu0 0.0
  %612 = vmatprep.subr.mxu0 0.0
  %613 = vmatpush1.msra.mxu0 0.0
  %614 = vmatprep.subr.mxu0 0.0
  %615 = vmatpush1.msra.mxu0 0.0
  %616 = vmatprep.subr.mxu0 0.0
  %617 = vmatpush1.msra.mxu0 0.0
  %618 = vmatprep.subr.mxu0 0.0
  %619 = vmatpush1.msra.mxu0 0.0
  %620 = vmatprep.subr.mxu0 0.0
  %621 = vmatpush1.msra.mxu0 0.0
  %622 = vmatprep.subr.mxu0 0.0
  %623 = vmatpush1.msra.mxu0 0.0
  %624 = vmatprep.subr.mxu0 0.0
  %625 = vmatpush1.msra.mxu0 0.0
  %626 = vmatprep.subr.mxu0 0.0
  %627 = vmatpush1.msra.mxu0 0.0
  %628 = vmatprep.subr.mxu0 0.0
  %629 = vmatpush1.msra.mxu0 0.0
  %630 = vmatprep.subr.mxu0 0.0
  %631 = vmatpush1.msra.mxu0 0.0
  %632 = vmatprep.subr.mxu0 0.0
  %633 = vmatpush1.msra.mxu0 0.0
  %634 = vmatprep.mubr.f32.mxu0 0.0
  %635 = vmatmul.mubr.f32.gmra.mrb[0].mxu0 %v559
  %v636 = vpop.f32.mrb[0].mxu0
  %v637 = vadd.f32 %v540, %v636
  %v638 = vpop.f32.mrb[0].mxu0
  %639 = vmatprep.mubr.f32.mxu0 0.0
  %640 = vmatmul.mubr.f32.gmra.mrb[0].mxu0 %v562
  %v641 = vpop.f32.mrb[0].mxu0
  %v642 = vadd.f32 %v545, %v641
  %v643 = vpop.f32.mrb[0].mxu0
  %644 = vmatprep.mubr.f32.mxu0 0.0
  %645 = vmatmul.mubr.f32.gmra.mrb[0].mxu0 %v565
  %v646 = vpop.f32.mrb[0].mxu0
  %v647 = vadd.f32 %v550, %v646
  %v648 = vpop.f32.mrb[0].mxu0
  %649 = vmatprep.mubr.f32.mxu0 0.0
  %650 = vmatmul.mubr.f32.gmra.mrb[0].mxu0 %v568
  %v651 = vpop.f32.mrb[0].mxu0
  %v652 = vadd.f32 %v555, %v651
  %v653 = vpop.f32.mrb[0].mxu0
  %654 = vdwg.mxu0
  %655 = vset.pattern.permute.xlu0 1
  %656 = vperm.xlu0 %655, %v12
  %v657 = vpop.permute.xlu0 %656
  %659 = vset.pattern.permute.xlu0 1
  %660 = vperm.xlu0 %659, %v13
  %v661 = vpop.permute.xlu0 %660
  %664 = vset.pattern.permute.xlu0 1
  %665 = vperm.xlu0 %664, %v14
  %v666 = vpop.permute.xlu0 %665
  %669 = vset.pattern.permute.xlu0 1
  %670 = vperm.xlu0 %669, %v15
  %v671 = vpop.permute.xlu0 %670
  %v673 = vadd.f32 %v637, %v657
  %v674 = vadd.f32 %v642, %v661
  %v675 = vadd.f32 %v647, %v666
  %v676 = vadd.f32 %v652, %v671
  %v677 = vmax.f32 %v673, 0.0
  %v678 = vmax.f32 %v674, 0.0
  %v679 = vmax.f32 %v675, 0.0
  %v680 = vmax.f32 %v676, 0.0
  %681 = vset.pattern.permute.xlu0 2
  %682 = vperm.xlu0 %681, %v12
  %v683 = vpop.permute.xlu0 %682
  %685 = vset.pattern.permute.xlu0 2
  %686 = vperm.xlu0 %685, %v13
  %v687 = vpop.permute.xlu0 %686
  %689 = vset.pattern.permute.xlu0 2
  %690 = vperm.xlu0 %689, %v14
  %v691 = vpop.permute.xlu0 %690
  %693 = vset.pattern.permute.xlu0 2
  %694 = vperm.xlu0 %693, %v15
  %v695 = vpop.permute.xlu0 %694
  %vm697 = vcmask 261120
  %v699 = vsel %vm697, %v24, 0
  %v702 = vsel %vm697, %v25, 0
  %v705 = vsel %vm697, %v26, 0
  %v708 = vsel %vm697, %v27, 0
  %710 = vmatprep.subr.mxu0 0.0
  %711 = vmatpush1.msra.mxu0 %v677
  %712 = vmatprep.subr.mxu0 0.0
  %713 = vmatpush1.msra.mxu0 %v678
  %714 = vmatprep.subr.mxu0 0.0
  %715 = vmatpush1.msra.mxu0 %v679
  %716 = vmatprep.subr.mxu0 0.0
  %717 = vmatpush1.msra.mxu0 %v680
  %718 = vmatprep.subr.mxu0 0.0
  %719 = vmatpush1.msra.mxu0 0.0
  %720 = vmatprep.subr.mxu0 0.0
  %721 = vmatpush1.msra.mxu0 0.0
  %722 = vmatprep.subr.mxu0 0.0
  %723 = vmatpush1.msra.mxu0 0.0
  %724 = vmatprep.subr.mxu0 0.0
  %725 = vmatpush1.msra.mxu0 0.0
  %726 = vmatprep.subr.mxu0 0.0
  %727 = vmatpush1.msra.mxu0 0.0
  %728 = vmatprep.subr.mxu0 0.0
  %729 = vmatpush1.msra.mxu0 0.0
  %730 = vmatprep.subr.mxu0 0.0
  %731 = vmatpush1.msra.mxu0 0.0
  %732 = vmatprep.subr.mxu0 0.0
  %733 = vmatpush1.msra.mxu0 0.0
  %734 = vmatprep.subr.mxu0 0.0
  %735 = vmatpush1.msra.mxu0 0.0
  %736 = vmatprep.subr.mxu0 0.0
  %737 = vmatpush1.msra.mxu0 0.0
  %738 = vmatprep.subr.mxu0 0.0
  %739 = vmatpush1.msra.mxu0 0.0
  %740 = vmatprep.subr.mxu0 0.0
  %741 = vmatpush1.msra.mxu0 0.0
  %742 = vmatprep.subr.mxu0 0.0
  %743 = vmatpush1.msra.mxu0 0.0
  %744 = vmatprep.subr.mxu0 0.0
  %745 = vmatpush1.msra.mxu0 0.0
  %746 = vmatprep.subr.mxu0 0.0
  %747 = vmatpush1.msra.mxu0 0.0
  %748 = vmatprep.subr.mxu0 0.0
  %749 = vmatpush1.msra.mxu0 0.0
  %750 = vmatprep.subr.mxu0 0.0
  %751 = vmatpush1.msra.mxu0 0.0
  %752 = vmatprep.subr.mxu0 0.0
  %753 = vmatpush1.msra.mxu0 0.0
  %754 = vmatprep.subr.mxu0 0.0
  %755 = vmatpush1.msra.mxu0 0.0
  %756 = vmatprep.subr.mxu0 0.0
  %757 = vmatpush1.msra.mxu0 0.0
  %758 = vmatprep.subr.mxu0 0.0
  %759 = vmatpush1.msra.mxu0 0.0
  %760 = vmatprep.subr.mxu0 0.0
  %761 = vmatpush1.msra.mxu0 0.0
  %762 = vmatprep.subr.mxu0 0.0
  %763 = vmatpush1.msra.mxu0 0.0
  %764 = vmatprep.subr.mxu0 0.0
  %765 = vmatpush1.msra.mxu0 0.0
  %766 = vmatprep.subr.mxu0 0.0
  %767 = vmatpush1.msra.mxu0 0.0
  %768 = vmatprep.subr.mxu0 0.0
  %769 = vmatpush1.msra.mxu0 0.0
  %770 = vmatprep.subr.mxu0 0.0
  %771 = vmatpush1.msra.mxu0 0.0
  %772 = vmatprep.subr.mxu0 0.0
  %773 = vmatpush1.msra.mxu0 0.0
  %774 = vmatprep.mubr.f32.mxu0 0.0
  %775 = vmatmul.mubr.f32.gmra.mrb[0].mxu0 %v699
  %v776 = vpop.f32.mrb[0].mxu0
  %v777 = vadd.f32 %v683, %v776
  %v778 = vpop.f32.mrb[0].mxu0
  %779 = vmatprep.mubr.f32.mxu0 0.0
  %780 = vmatmul.mubr.f32.gmra.mrb[0].mxu0 %v702
  %v781 = vpop.f32.mrb[0].mxu0
  %v782 = vadd.f32 %v687, %v781
  %v783 = vpop.f32.mrb[0].mxu0
  %784 = vmatprep.mubr.f32.mxu0 0.0
  %785 = vmatmul.mubr.f32.gmra.mrb[0].mxu0 %v705
  %v786 = vpop.f32.mrb[0].mxu0
  %v787 = vadd.f32 %v691, %v786
  %v788 = vpop.f32.mrb[0].mxu0
  %789 = vmatprep.mubr.f32.mxu0 0.0
  %790 = vmatmul.mubr.f32.gmra.mrb[0].mxu0 %v708
  %v791 = vpop.f32.mrb[0].mxu0
  %v792 = vadd.f32 %v695, %v791
  %v793 = vpop.f32.mrb[0].mxu0
  %794 = vdwg.mxu0
  %vm795 = vcmask 64512
  %796 = vst.msk [vmem:[%s2] sm:$0xff] %vm795, %v777
  %797 = vst.msk [vmem:[%s2 + $0x8] sm:$0xff] %vm795, %v782
  %798 = vst.msk [vmem:[%s2 + $0x10] sm:$0xff] %vm795, %v787
  %799 = vst.msk [vmem:[%s2 + $0x18] sm:$0xff] %vm795, %v792
  // Predicated region
  $region10: #{tpu_custom_call.1} parent=0 // pred_check
    _
  $region11: #{tpu_custom_call.1} parent=0 // pred_check_branch
    %801 = sbr.rel (0) target = $region13
  $region12: #{tpu_custom_call.1} parent=0 // pred_region
    _
  $region13: #{tpu_custom_call.1} parent=0 // pred_fallthru
    _
  // Predicated region
  $region14: #{tpu_custom_call.1} parent=0 // pred_check
    _
  $region15: #{tpu_custom_call.1} parent=0 // pred_check_branch
    %803 = sbr.rel (0) target = $region17
  $region16: #{tpu_custom_call.1} parent=0 // pred_region
    _
  $region17: #{tpu_custom_call.1} parent=0 // pred_fallthru
    _

</llo_original>
